<compile_context>
chip_gen: v7x
topology: tpu7x:2x2x1
jax: 0.10.0
libtpu: 0.0.40
codegen_flags: <defaults>
</compile_context>

<pallas_src>
import jax
import jax.numpy as jnp
from jax.experimental import pallas as pl
from jax.experimental.pallas import tpu as pltpu

LANE = 128


def _round_up(n, m):
    return ((n + m - 1) // m) * m


def _pick_tile(n, candidates):
    for c in candidates:
        if n % c == 0:
            return c
    return n


def _pad2(a, rows, cols):
    return jnp.pad(a, ((0, rows - a.shape[0]), (0, cols - a.shape[1])))


# ---------------------------------------------------------------------------
# Kernel 1: x_lin = x @ Wlin + blin   (row-tiled, bf16 inputs, f32 accum)
# ---------------------------------------------------------------------------
def _xlin_kernel(x_ref, wlin_ref, blin_ref, out_ref):
    acc = jnp.dot(x_ref[...], wlin_ref[...], preferred_element_type=jnp.float32)
    out_ref[...] = (acc + blin_ref[...]).astype(out_ref.dtype)


# ---------------------------------------------------------------------------
# Kernel 2 (fused):
#   acc = Ahat @ x_lin          (tiled reduction over column tiles)
#   z   = relu(acc)             (AMPConv denoiser == ReLU, onsager == 0)
#   y   = relu(z @ W1 + b1) @ W2 + b2   (VAMPBlock denoiser MLP)
# grid = (row tiles [parallel], reduction tiles [arbitrary])
# ---------------------------------------------------------------------------
def _vamp_kernel(adj_ref, xlin_ref, w1_ref, b1_ref, w2_ref, b2_ref,
                 out_ref, acc_ref):
    k = pl.program_id(1)

    @pl.when(k == 0)
    def _():
        acc_ref[...] = jnp.zeros_like(acc_ref)

    acc_ref[...] += jnp.dot(adj_ref[...], xlin_ref[...],
                            preferred_element_type=jnp.float32)

    @pl.when(k == pl.num_programs(1) - 1)
    def _():
        z = jnp.maximum(acc_ref[...], 0.0)
        h = jnp.dot(z.astype(w1_ref.dtype), w1_ref[...],
                    preferred_element_type=jnp.float32) + b1_ref[...]
        h = jnp.maximum(h, 0.0)
        y = jnp.dot(h.astype(w2_ref.dtype), w2_ref[...],
                    preferred_element_type=jnp.float32) + b2_ref[...]
        out_ref[...] = y.astype(out_ref.dtype)


def vamp_block_forward(x, edge_index, wlin, blin, w1, b1, w2, b2):
    """x: [N, in_c] f32; edge_index: [2, E] int32.
    Weights pre-transposed as [fan_in, fan_out]; biases as [1, fan_out]."""
    N, in_c = x.shape
    out_c = w2.shape[1]
    hid_c = w1.shape[1]

    # --- glue: normalized dense adjacency via one-hot matmuls (no scatter) ---
    self_loops = jnp.arange(N, dtype=edge_index.dtype)
    row = jnp.concatenate([edge_index[0], self_loops])
    col = jnp.concatenate([edge_index[1], self_loops])
    oh_row = jax.nn.one_hot(row, N, dtype=jnp.float32)      # [E+N, N]
    oh_col = jax.nn.one_hot(col, N, dtype=jnp.float32)
    deg = jnp.sum(oh_row, axis=0)                            # degree(row) >= 1
    dis = deg ** -0.5
    norm = (oh_row @ dis) * (oh_col @ dis)                   # [E+N]
    adj = (oh_row * norm[:, None]).T @ oh_col                # Ahat [N, N]

    # TODO(synk): AMPConv's onsager / prev_out / history updates are stateful
    # side effects (with fresh gaussian noise) that do NOT affect the value
    # returned by a single forward call (onsager starts at 0.0), so they are
    # intentionally not reproduced in this stateless kernel.

    # --- lane/sublane padding (128-lane dense) ---
    n_pad = _round_up(N, LANE)
    inp = _round_up(in_c, LANE)
    cp = _round_up(out_c, LANE)
    hp = _round_up(hid_c, LANE)

    adj_p = _pad2(adj, n_pad, n_pad).astype(jnp.bfloat16)
    x_p = _pad2(x, n_pad, inp).astype(jnp.bfloat16)
    wlin_p = _pad2(wlin, inp, cp).astype(jnp.bfloat16)
    blin_p = _pad2(blin, 1, cp).astype(jnp.float32)
    w1_p = _pad2(w1, cp, hp).astype(jnp.bfloat16)
    b1_p = _pad2(b1, 1, hp).astype(jnp.float32)
    w2_p = _pad2(w2, hp, cp).astype(jnp.bfloat16)
    b2_p = _pad2(b2, 1, cp).astype(jnp.float32)

    # v7x-safe tiles: bf16 adj tile of (256, 1024) is 512 KiB/buffer.
    tm = _pick_tile(n_pad, (256, 128, 64, 32, 16, 8))
    tk = _pick_tile(n_pad, (1024, 512, 256, 128))

    # --- kernel 1: x_lin (bf16 output feeds the MXU in kernel 2) ---
    x_lin = pl.pallas_call(
        _xlin_kernel,
        out_shape=jax.ShapeDtypeStruct((n_pad, cp), jnp.bfloat16),
        grid_spec=pltpu.PrefetchScalarGridSpec(
            num_scalar_prefetch=0,
            grid=(n_pad // tm,),
            in_specs=[
                pl.BlockSpec((tm, inp), lambda i: (i, 0)),
                pl.BlockSpec((inp, cp), lambda i: (0, 0)),
                pl.BlockSpec((1, cp), lambda i: (0, 0)),
            ],
            out_specs=pl.BlockSpec((tm, cp), lambda i: (i, 0)),
        ),
        compiler_params=pltpu.CompilerParams(
            dimension_semantics=("parallel",)),
    )(x_p, wlin_p, blin_p)

    # --- kernel 2: tiled aggregation + fused MLP denoiser ---
    flops = int(2 * n_pad * n_pad * cp + 2 * n_pad * (cp * hp + hp * cp))
    bytes_accessed = int(adj_p.size * 2 + x_lin.size * 2 + n_pad * cp * 4
                         + (w1_p.size + w2_p.size) * 2
                         + (b1_p.size + b2_p.size) * 4)

    out_pad = pl.pallas_call(
        _vamp_kernel,
        out_shape=jax.ShapeDtypeStruct((n_pad, cp), jnp.float32),
        grid_spec=pltpu.PrefetchScalarGridSpec(
            num_scalar_prefetch=0,
            grid=(n_pad // tm, n_pad // tk),
            in_specs=[
                pl.BlockSpec((tm, tk), lambda i, k: (i, k)),   # Ahat tile
                pl.BlockSpec((tk, cp), lambda i, k: (k, 0)),   # x_lin rows
                pl.BlockSpec((cp, hp), lambda i, k: (0, 0)),   # resident W1
                pl.BlockSpec((1, hp), lambda i, k: (0, 0)),    # resident b1
                pl.BlockSpec((hp, cp), lambda i, k: (0, 0)),   # resident W2
                pl.BlockSpec((1, cp), lambda i, k: (0, 0)),    # resident b2
            ],
            out_specs=pl.BlockSpec((tm, cp), lambda i, k: (i, 0)),
            scratch_shapes=[pltpu.VMEM((tm, cp), jnp.float32)],
        ),
        compiler_params=pltpu.CompilerParams(
            dimension_semantics=("parallel", "arbitrary"),
            vmem_limit_bytes=32 * 1024 * 1024),
        cost_estimate=pl.CostEstimate(
            flops=flops, transcendentals=0, bytes_accessed=bytes_accessed),
    )(adj_p, x_lin, w1_p, b1_p, w2_p, b2_p)

    return out_pad[:N, :out_c]


def _reference(x, edge_index, wlin, blin, w1, b1, w2, b2):
    N = x.shape[0]
    self_loops = jnp.arange(N, dtype=edge_index.dtype)
    row = jnp.concatenate([edge_index[0], self_loops])
    col = jnp.concatenate([edge_index[1], self_loops])
    deg = jnp.zeros((N,), x.dtype).at[row].add(jnp.ones_like(row, x.dtype))
    dis = deg ** -0.5
    norm = dis[row] * dis[col]
    x_lin = x @ wlin + blin
    m = jnp.zeros_like(x_lin).at[row].add(norm[:, None] * x_lin[col])
    z = jax.nn.relu(m)
    h = jax.nn.relu(z @ w1 + b1)
    return h @ w2 + b2


if __name__ == "__main__":
    key = jax.random.PRNGKey(0)
    N, IN_C, HID_C, OUT_C = 64, 16, 32, 16
    k_x, k_wl, k_bl, k_w1, k_b1, k_w2, k_b2 = jax.random.split(key, 7)

    x = jax.random.normal(k_x, (N, IN_C), jnp.float32)

    # deterministic small graph: bidirectional ring
    src = jnp.arange(N, dtype=jnp.int32)
    dst = (src + 1) % N
    edge_index = jnp.stack([jnp.concatenate([src, dst]),
                            jnp.concatenate([dst, src])], axis=0)

    # deterministic Linear params (nn.Linear-style uniform init), stored as
    # [fan_in, fan_out] so the kernel computes x @ W (== x @ W_pt^T).
    def lin_init(kw, kb, fan_in, fan_out):
        bound = 1.0 / float(fan_in) ** 0.5
        w = jax.random.uniform(kw, (fan_in, fan_out), jnp.float32, -bound, bound)
        b = jax.random.uniform(kb, (1, fan_out), jnp.float32, -bound, bound)
        return w, b

    wlin, blin = lin_init(k_wl, k_bl, IN_C, OUT_C)   # AMPConv.lin
    w1, b1 = lin_init(k_w1, k_b1, OUT_C, HID_C)      # VAMPBlock.denoiser[0]
    w2, b2 = lin_init(k_w2, k_b2, HID_C, OUT_C)      # VAMPBlock.denoiser[2]

    out = vamp_block_forward(x, edge_index, wlin, blin, w1, b1, w2, b2)
    jax.block_until_ready(out)

    ref = _reference(x, edge_index, wlin, blin, w1, b1, w2, b2)
    assert out.shape == (N, OUT_C)
    # bf16 matmul inputs (f32 accumulation) -> relaxed tolerance vs f32 reference
    assert jnp.allclose(out, ref, atol=3e-2, rtol=3e-2), "mismatch vs JAX reference"
    print("KERNEL_OK")
</pallas_src>

<mosaic_0001>
module attributes {stable_mosaic.version = 11 : i64} {
  func.func @_xlin_kernel(%arg0: i32, %arg1: memref<128x128xbf16, #tpu.memory_space<vmem>>, %arg2: memref<128x128xbf16, #tpu.memory_space<vmem>>, %arg3: memref<1x128xf32, #tpu.memory_space<vmem>>, %arg4: memref<128x128xbf16, #tpu.memory_space<vmem>>) attributes {dimension_semantics = [#tpu.dimension_semantics<parallel>], iteration_bounds = array<i64: 1>, scalar_prefetch = 0 : i64, scratch_operands = 0 : i64, tpu.core_type = #tpu.core_type<tc>, window_params = [{transform_indices = @transform_0, window_bounds = array<i64: 128, 128>}, {pipeline_mode = #tpu.pipeline_mode<synchronous>, transform_indices = @transform_1, window_bounds = array<i64: 128, 128>}, {pipeline_mode = #tpu.pipeline_mode<synchronous>, transform_indices = @transform_2, window_bounds = array<i64: 1, 128>}, {transform_indices = @transform_3, window_bounds = array<i64: 128, 128>}]} {
    %c0 = arith.constant 0 : index
    %c0_0 = arith.constant 0 : index
    %0 = vector.load %arg1[%c0, %c0_0] : memref<128x128xbf16, #tpu.memory_space<vmem>>, vector<128x128xbf16>
    %c0_1 = arith.constant 0 : index
    %c0_2 = arith.constant 0 : index
    %1 = vector.load %arg2[%c0_1, %c0_2] : memref<128x128xbf16, #tpu.memory_space<vmem>>, vector<128x128xbf16>
    %cst = arith.constant dense<0.000000e+00> : vector<128x128xf32>
    %2 = tpu.matmul %0, %1, %cst {dimension_numbers = #tpu.dot_dimension_numbers<[1], [0], [0], [1], [0, 0, 1, 1], [], []>} : vector<128x128xbf16>, vector<128x128xbf16>, vector<128x128xf32> -> vector<128x128xf32>
    %c0_3 = arith.constant 0 : index
    %c0_4 = arith.constant 0 : index
    %3 = vector.load %arg3[%c0_3, %c0_4] : memref<1x128xf32, #tpu.memory_space<vmem>>, vector<1x128xf32>
    %4 = vector.broadcast %3 : vector<1x128xf32> to vector<128x128xf32>
    %5 = arith.addf %2, %4 : vector<128x128xf32>
    %6 = arith.truncf %5 : vector<128x128xf32> to vector<128x128xbf16>
    %c0_5 = arith.constant 0 : index
    %c0_6 = arith.constant 0 : index
    %7 = vector.load %arg4[%c0_5, %c0_6] : memref<128x128xbf16, #tpu.memory_space<vmem>>, vector<128x128xbf16>
    tpu.vector_store %arg4[%c0_5, %c0_6], %6 {strides = array<i32>} : memref<128x128xbf16, #tpu.memory_space<vmem>>, vector<128x128xbf16>,
    return
  }
  func.func @transform_0(%arg0: i32) -> (i32, i32) {
    %c0_i32 = arith.constant 0 : i32
    %c0_i32_0 = arith.constant 0 : i32
    return %arg0, %c0_i32 : i32, i32
  }
  func.func @transform_1(%arg0: i32) -> (i32, i32) {
    %c0_i32 = arith.constant 0 : i32
    %c0_i32_0 = arith.constant 0 : i32
    %c0_i32_1 = arith.constant 0 : i32
    return %c0_i32, %c0_i32_0 : i32, i32
  }
  func.func @transform_2(%arg0: i32) -> (i32, i32) {
    %c0_i32 = arith.constant 0 : i32
    %c0_i32_0 = arith.constant 0 : i32
    %c0_i32_1 = arith.constant 0 : i32
    return %c0_i32, %c0_i32_0 : i32, i32
  }
  func.func @transform_3(%arg0: i32) -> (i32, i32) {
    %c0_i32 = arith.constant 0 : i32
    %c0_i32_0 = arith.constant 0 : i32
    return %arg0, %c0_i32 : i32, i32
  }
}

</mosaic_0001>

<llo_original>
// kernel: tpu_custom_call.1
$region0: #{tpu_custom_call.1}
  #allocation0 [shape = 'u32[]', space=smem, size = 0x4, offset = 0x4, fixed_abs, tag = 'smem constant byte address 0x4 - core index']
  #allocation1 [shape = 'u32[144,128]{1,0:T(1,128)}', space=vmem, size = 0x12000, scoped, tag = 'internal scratch']
  %s0 = inlined_call_operand.hbm [shape: bf16[128,128], index: 0, kind: input, shape index: {}]
  %s1 = inlined_call_operand.hbm [shape: bf16[128,128], index: 1, kind: input, shape index: {}]
  %s2 = inlined_call_operand.vmem [shape: f32[1,128], index: 2, kind: input, shape index: {}]
  %s3 = inlined_call_operand.hbm [shape: bf16[128,128], index: 3, kind: output, shape index: {}]
  %s4 = sld [smem:[#allocation0]]
  $region30: #{tpu_custom_call.1} parent=0
    _
  %s6 = ssub.s32 1, %s4
  %s7 = scalar_select 0, %s6, %s4
  $region1: #{tpu_custom_call.1} parent=0
    #allocation2 [shape = 'u8[32768]{0}', space=vmem, size = 0x8000, scoped, tag = 'input window, operand 0, single buffered']
    #allocation3 [shape = 's32[1]{0}', space=sflag, size = 0x4, scoped, tag = 'scoped memory for tpu_custom_call.1']
    #allocation4 [shape = 's32[1]{0}', space=sflag, size = 0x4, scoped, tag = 'scoped memory for tpu_custom_call.1']
    #allocation5 [shape = 'u8[32768]{0}', space=vmem, size = 0x8000, scoped, tag = 'input window, operand 1, single buffered']
    #allocation6 [shape = 's32[1]{0}', space=sflag, size = 0x4, scoped, tag = 'scoped memory for tpu_custom_call.1']
    #allocation7 [shape = 'u8[32768]{0}', space=vmem, size = 0x8000, scoped, tag = 'output window, operand 0, single buffered']
    %8 = vsyncpa [#allocation3], 0
    %9 = vsyncpa [#allocation6], 0
    %10 = vsyncpa [#allocation4], 0
    // Predicated region
    $region2: #{tpu_custom_call.1} parent=1 // pred_check
      _
    $region3: #{tpu_custom_call.1} parent=1 // pred_check_branch
      %12 = sbr.rel (0) target = $region5
    $region4: #{tpu_custom_call.1} parent=1 // pred_region
      %s14 = ssub.s32 1024, 1024
      %15 = vsyncadd [#allocation3], %s14
      %s16 = sshll.u32 [#allocation2], 4
      %s17 = int_to_ptr.vmem [resolvable:$true] %s16
      %22 = dma.hbm_to_vmem [thread:$0]  %s0, 1024, %s17, [#allocation3], 64, 64, 4
    $region5: #{tpu_custom_call.1} parent=1 // pred_fallthru
      _
    // Predicated region
    $region6: #{tpu_custom_call.1} parent=1 // pred_check
      _
    $region7: #{tpu_custom_call.1} parent=1 // pred_check_branch
      %24 = sbr.rel (0) target = $region9
    $region8: #{tpu_custom_call.1} parent=1 // pred_region
      %s26 = ssub.s32 1024, 1024
      %27 = vsyncadd [#allocation6], %s26
      %s28 = sshll.u32 [#allocation5], 4
      %s29 = int_to_ptr.vmem [resolvable:$true] %s28
      %34 = dma.hbm_to_vmem [thread:$0]  %s1, 1024, %s29, [#allocation6], 64, 64, 4
    $region9: #{tpu_custom_call.1} parent=1 // pred_fallthru
      _
    // Predicated region
    $region10: #{tpu_custom_call.1} parent=1 // pred_check
      _
    $region11: #{tpu_custom_call.1} parent=1 // pred_check_branch
      %36 = sbr.rel (0) target = $region13
    $region12: #{tpu_custom_call.1} parent=1 // pred_region
      _
    $region13: #{tpu_custom_call.1} parent=1 // pred_fallthru
      _
    // Predicated region
    $region14: #{tpu_custom_call.1} parent=1 // pred_check
      _
    $region15: #{tpu_custom_call.1} parent=1 // pred_check_branch
      %38 = sbr.rel (0) target = $region17
    $region16: #{tpu_custom_call.1} parent=1 // pred_region
      %39 = dma.done [#allocation3], 1024
    $region17: #{tpu_custom_call.1} parent=1 // pred_fallthru
      _
    // Predicated region
    $region18: #{tpu_custom_call.1} parent=1 // pred_check
      _
    $region19: #{tpu_custom_call.1} parent=1 // pred_check_branch
      %41 = sbr.rel (0) target = $region21
    $region20: #{tpu_custom_call.1} parent=1 // pred_region
      %42 = dma.done [#allocation6], 1024
    $region21: #{tpu_custom_call.1} parent=1 // pred_fallthru
      _
    %v44 = vld [vmem:[#allocation2] sm:$0xf]
    %v45 = vld [vmem:[#allocation2 + $0x4] sm:$0xf]
    %v46 = vld [vmem:[#allocation2 + $0x8] sm:$0xf]
    %v47 = vld [vmem:[#allocation2 + $0xc] sm:$0xf]
    %v48 = vld [vmem:[#allocation2 + $0x10] sm:$0xf]
    %v49 = vld [vmem:[#allocation2 + $0x14] sm:$0xf]
    %v50 = vld [vmem:[#allocation2 + $0x18] sm:$0xf]
    %v51 = vld [vmem:[#allocation2 + $0x1c] sm:$0xf]
    %v52 = vld [vmem:[#allocation2 + $0x20] sm:$0xf]
    %v53 = vld [vmem:[#allocation2 + $0x24] sm:$0xf]
    %v54 = vld [vmem:[#allocation2 + $0x28] sm:$0xf]
    %v55 = vld [vmem:[#allocation2 + $0x2c] sm:$0xf]
    %v56 = vld [vmem:[#allocation2 + $0x30] sm:$0xf]
    %v57 = vld [vmem:[#allocation2 + $0x34] sm:$0xf]
    %v58 = vld [vmem:[#allocation2 + $0x38] sm:$0xf]
    %v59 = vld [vmem:[#allocation2 + $0x3c] sm:$0xf]
    %v60 = vld [vmem:[#allocation5] sm:$0xf]
    %v61 = vld [vmem:[#allocation5 + $0x4] sm:$0xf]
    %v62 = vld [vmem:[#allocation5 + $0x8] sm:$0xf]
    %v63 = vld [vmem:[#allocation5 + $0xc] sm:$0xf]
    %v64 = vld [vmem:[#allocation5 + $0x10] sm:$0xf]
    %v65 = vld [vmem:[#allocation5 + $0x14] sm:$0xf]
    %v66 = vld [vmem:[#allocation5 + $0x18] sm:$0xf]
    %v67 = vld [vmem:[#allocation5 + $0x1c] sm:$0xf]
    %v68 = vld [vmem:[#allocation5 + $0x20] sm:$0xf]
    %v69 = vld [vmem:[#allocation5 + $0x24] sm:$0xf]
    %v70 = vld [vmem:[#allocation5 + $0x28] sm:$0xf]
    %v71 = vld [vmem:[#allocation5 + $0x2c] sm:$0xf]
    %v72 = vld [vmem:[#allocation5 + $0x30] sm:$0xf]
    %v73 = vld [vmem:[#allocation5 + $0x34] sm:$0xf]
    %v74 = vld [vmem:[#allocation5 + $0x38] sm:$0xf]
    %v75 = vld [vmem:[#allocation5 + $0x3c] sm:$0xf]
    %v76 = vld [vmem:[%s2] sm:$0x1]
    %v78 = vlaneseq
    %v79 = vshrl.u32 %v78, 7
    %v80 = vsub.s32 0, %v79
    %v81 = vrot.slane %v76, %v80
    %v99 = vunpack.c.l.b16 %v44
    %v100 = vunpack.c.l.b16 %v45
    %v101 = vunpack.c.l.b16 %v46
    %v102 = vunpack.c.l.b16 %v47
    %v103 = vunpack.c.l.b16 %v48
    %v104 = vunpack.c.l.b16 %v49
    %v105 = vunpack.c.l.b16 %v50
    %v106 = vunpack.c.l.b16 %v51
    %v107 = vunpack.c.l.b16 %v52
    %v108 = vunpack.c.l.b16 %v53
    %v109 = vunpack.c.l.b16 %v54
    %v110 = vunpack.c.l.b16 %v55
    %v111 = vunpack.c.l.b16 %v56
    %v112 = vunpack.c.l.b16 %v57
    %v113 = vunpack.c.l.b16 %v58
    %v114 = vunpack.c.l.b16 %v59
    %v115 = vpack.c.b16 %v100, %v99
    %v116 = vpack.c.b16 %v102, %v101
    %v117 = vpack.c.b16 %v104, %v103
    %v118 = vpack.c.b16 %v106, %v105
    %v119 = vpack.c.b16 %v108, %v107
    %v120 = vpack.c.b16 %v110, %v109
    %v121 = vpack.c.b16 %v112, %v111
    %v122 = vpack.c.b16 %v114, %v113
    %v147 = vunpack.c.l.b16 %v60
    %v148 = vunpack.c.l.b16 %v61
    %v149 = vunpack.c.l.b16 %v62
    %v150 = vunpack.c.l.b16 %v63
    %v151 = vunpack.c.l.b16 %v64
    %v152 = vunpack.c.l.b16 %v65
    %v153 = vunpack.c.l.b16 %v66
    %v154 = vunpack.c.l.b16 %v67
    %v155 = vunpack.c.l.b16 %v68
    %v156 = vunpack.c.l.b16 %v69
    %v157 = vunpack.c.l.b16 %v70
    %v158 = vunpack.c.l.b16 %v71
    %v159 = vunpack.c.l.b16 %v72
    %v160 = vunpack.c.l.b16 %v73
    %v161 = vunpack.c.l.b16 %v74
    %v162 = vunpack.c.l.b16 %v75
    %v163 = vpack.c.b16 %v148, %v147
    %v164 = vpack.c.b16 %v150, %v149
    %v165 = vpack.c.b16 %v152, %v151
    %v166 = vpack.c.b16 %v154, %v153
    %v167 = vpack.c.b16 %v156, %v155
    %v168 = vpack.c.b16 %v158, %v157
    %v169 = vpack.c.b16 %v160, %v159
    %v170 = vpack.c.b16 %v162, %v161
    %179 = vmatprep.subr.bf16.mxu0 0
    %180 = vmatpush1.bf16.msra.mxu0 %v163
    %181 = vmatprep.subr.bf16.mxu0 0
    %182 = vmatpush1.bf16.msra.mxu0 %v164
    %183 = vmatprep.subr.bf16.mxu0 0
    %184 = vmatpush1.bf16.msra.mxu0 %v165
    %185 = vmatprep.subr.bf16.mxu0 0
    %186 = vmatpush1.bf16.msra.mxu0 %v166
    %187 = vmatprep.subr.bf16.mxu0 0
    %188 = vmatpush1.bf16.msra.mxu0 %v167
    %189 = vmatprep.subr.bf16.mxu0 0
    %190 = vmatpush1.bf16.msra.mxu0 %v168
    %191 = vmatprep.subr.bf16.mxu0 0
    %192 = vmatpush1.bf16.msra.mxu0 %v169
    %193 = vmatprep.subr.bf16.mxu0 0
    %194 = vmatpush1.bf16.msra.mxu0 %v170
    %195 = vmatprep.subr.bf16.mxu0 0
    %196 = vmatpush1.bf16.msra.mxu0 0
    %197 = vmatprep.subr.bf16.mxu0 0
    %198 = vmatpush1.bf16.msra.mxu0 0
    %199 = vmatprep.subr.bf16.mxu0 0
    %200 = vmatpush1.bf16.msra.mxu0 0
    %201 = vmatprep.subr.bf16.mxu0 0
    %202 = vmatpush1.bf16.msra.mxu0 0
    %203 = vmatprep.subr.bf16.mxu0 0
    %204 = vmatpush1.bf16.msra.mxu0 0
    %205 = vmatprep.subr.bf16.mxu0 0
    %206 = vmatpush1.bf16.msra.mxu0 0
    %207 = vmatprep.subr.bf16.mxu0 0
    %208 = vmatpush1.bf16.msra.mxu0 0
    %209 = vmatprep.subr.bf16.mxu0 0
    %210 = vmatpush1.bf16.msra.mxu0 0
    %211 = vmatprep.mubr.bf16.mxu0 0
    %212 = vmatmul.mubr.bf16.gmra.mrb[0].mxu0 %v115
    %v213 = vpop.f32.mrb[0].mxu0
    %v214 = vadd.f32 %v81, %v213
    %v215 = vpop.f32.mrb[0].mxu0
    %v216 = vpop.f32.mrb[0].mxu0
    %v217 = vadd.f32 %v81, %v216
    %v218 = vpop.f32.mrb[0].mxu0
    %219 = vmatprep.mubr.bf16.mxu0 0
    %220 = vmatmul.mubr.bf16.gmra.mrb[0].mxu0 %v116
    %v221 = vpop.f32.mrb[0].mxu0
    %v222 = vadd.f32 %v81, %v221
    %v223 = vpop.f32.mrb[0].mxu0
    %v224 = vpop.f32.mrb[0].mxu0
    %v225 = vadd.f32 %v81, %v224
    %v226 = vpop.f32.mrb[0].mxu0
    %227 = vmatprep.mubr.bf16.mxu0 0
    %228 = vmatmul.mubr.bf16.gmra.mrb[0].mxu0 %v117
    %v229 = vpop.f32.mrb[0].mxu0
    %v230 = vadd.f32 %v81, %v229
    %v231 = vpop.f32.mrb[0].mxu0
    %v232 = vpop.f32.mrb[0].mxu0
    %v233 = vadd.f32 %v81, %v232
    %v234 = vpop.f32.mrb[0].mxu0
    %235 = vmatprep.mubr.bf16.mxu0 0
    %236 = vmatmul.mubr.bf16.gmra.mrb[0].mxu0 %v118
    %v237 = vpop.f32.mrb[0].mxu0
    %v238 = vadd.f32 %v81, %v237
    %v239 = vpop.f32.mrb[0].mxu0
    %v240 = vpop.f32.mrb[0].mxu0
    %v241 = vadd.f32 %v81, %v240
    %v242 = vpop.f32.mrb[0].mxu0
    %243 = vmatprep.mubr.bf16.mxu0 0
    %244 = vmatmul.mubr.bf16.gmra.mrb[0].mxu0 %v119
    %v245 = vpop.f32.mrb[0].mxu0
    %v246 = vadd.f32 %v81, %v245
    %v247 = vpop.f32.mrb[0].mxu0
    %v248 = vpop.f32.mrb[0].mxu0
    %v249 = vadd.f32 %v81, %v248
    %v250 = vpop.f32.mrb[0].mxu0
    %251 = vmatprep.mubr.bf16.mxu0 0
    %252 = vmatmul.mubr.bf16.gmra.mrb[0].mxu0 %v120
    %v253 = vpop.f32.mrb[0].mxu0
    %v254 = vadd.f32 %v81, %v253
    %v255 = vpop.f32.mrb[0].mxu0
    %v256 = vpop.f32.mrb[0].mxu0
    %v257 = vadd.f32 %v81, %v256
    %v258 = vpop.f32.mrb[0].mxu0
    %259 = vmatprep.mubr.bf16.mxu0 0
    %260 = vmatmul.mubr.bf16.gmra.mrb[0].mxu0 %v121
    %v261 = vpop.f32.mrb[0].mxu0
    %v262 = vadd.f32 %v81, %v261
    %v263 = vpop.f32.mrb[0].mxu0
    %v264 = vpop.f32.mrb[0].mxu0
    %v265 = vadd.f32 %v81, %v264
    %v266 = vpop.f32.mrb[0].mxu0
    %267 = vmatprep.mubr.bf16.mxu0 0
    %268 = vmatmul.mubr.bf16.gmra.mrb[0].mxu0 %v122
    %v269 = vpop.f32.mrb[0].mxu0
    %v270 = vadd.f32 %v81, %v269
    %v271 = vpop.f32.mrb[0].mxu0
    %v272 = vpop.f32.mrb[0].mxu0
    %v273 = vadd.f32 %v81, %v272
    %v274 = vpop.f32.mrb[0].mxu0
    %275 = vdwg.mxu0
    %v276 = vpack.c.bf16 %v217, %v214
    %v277 = vpack.c.bf16 %v225, %v222
    %v278 = vpack.c.bf16 %v233, %v230
    %v279 = vpack.c.bf16 %v241, %v238
    %v280 = vpack.c.bf16 %v249, %v246
    %v281 = vpack.c.bf16 %v257, %v254
    %v282 = vpack.c.bf16 %v265, %v262
    %v283 = vpack.c.bf16 %v273, %v270
    %v292 = vunpack.c.l.b16 %v276
    %v293 = vunpack.c.h.b16 %v276
    %v294 = vunpack.c.l.b16 %v277
    %v295 = vunpack.c.h.b16 %v277
    %v296 = vunpack.c.l.b16 %v278
    %v297 = vunpack.c.h.b16 %v278
    %v298 = vunpack.c.l.b16 %v279
    %v299 = vunpack.c.h.b16 %v279
    %v300 = vunpack.c.l.b16 %v280
    %v301 = vunpack.c.h.b16 %v280
    %v302 = vunpack.c.l.b16 %v281
    %v303 = vunpack.c.h.b16 %v281
    %v304 = vunpack.c.l.b16 %v282
    %v305 = vunpack.c.h.b16 %v282
    %v306 = vunpack.c.l.b16 %v283
    %v307 = vunpack.c.h.b16 %v283
    %v308 = vpack.c.b16 %v292, %v292
    %v309 = vpack.c.b16 %v293, %v293
    %v310 = vpack.c.b16 %v294, %v294
    %v311 = vpack.c.b16 %v295, %v295
    %v312 = vpack.c.b16 %v296, %v296
    %v313 = vpack.c.b16 %v297, %v297
    %v314 = vpack.c.b16 %v298, %v298
    %v315 = vpack.c.b16 %v299, %v299
    %v316 = vpack.c.b16 %v300, %v300
    %v317 = vpack.c.b16 %v301, %v301
    %v318 = vpack.c.b16 %v302, %v302
    %v319 = vpack.c.b16 %v303, %v303
    %v320 = vpack.c.b16 %v304, %v304
    %v321 = vpack.c.b16 %v305, %v305
    %v322 = vpack.c.b16 %v306, %v306
    %v323 = vpack.c.b16 %v307, %v307
    %340 = vst [vmem:[#allocation7] sm:$0xf] %v308
    %341 = vst [vmem:[#allocation7 + $0x4] sm:$0xf] %v309
    %342 = vst [vmem:[#allocation7 + $0x8] sm:$0xf] %v310
    %343 = vst [vmem:[#allocation7 + $0xc] sm:$0xf] %v311
    %344 = vst [vmem:[#allocation7 + $0x10] sm:$0xf] %v312
    %345 = vst [vmem:[#allocation7 + $0x14] sm:$0xf] %v313
    %346 = vst [vmem:[#allocation7 + $0x18] sm:$0xf] %v314
    %347 = vst [vmem:[#allocation7 + $0x1c] sm:$0xf] %v315
    %348 = vst [vmem:[#allocation7 + $0x20] sm:$0xf] %v316
    %349 = vst [vmem:[#allocation7 + $0x24] sm:$0xf] %v317
    %350 = vst [vmem:[#allocation7 + $0x28] sm:$0xf] %v318
    %351 = vst [vmem:[#allocation7 + $0x2c] sm:$0xf] %v319
    %352 = vst [vmem:[#allocation7 + $0x30] sm:$0xf] %v320
    %353 = vst [vmem:[#allocation7 + $0x34] sm:$0xf] %v321
    %354 = vst [vmem:[#allocation7 + $0x38] sm:$0xf] %v322
    %355 = vst [vmem:[#allocation7 + $0x3c] sm:$0xf] %v323
    // Predicated region
    $region22: #{tpu_custom_call.1} parent=1 // pred_check
      _
    $region23: #{tpu_custom_call.1} parent=1 // pred_check_branch
      %357 = sbr.rel (0) target = $region25
    $region24: #{tpu_custom_call.1} parent=1 // pred_region
      %s359 = ssub.s32 1024, 1024
      %360 = vsyncadd [#allocation4], %s359
      %s361 = sshll.u32 [#allocation7], 4
      %s362 = int_to_ptr.vmem [resolvable:$true] %s361
      %367 = dma.vmem_to_hbm [thread:$0]  %s362, 1024, %s3, [#allocation4], 64, 64, 4
    $region25: #{tpu_custom_call.1} parent=1 // pred_fallthru
      _
    // Predicated region
    $region26: #{tpu_custom_call.1} parent=1 // pred_check
      _
    $region27: #{tpu_custom_call.1} parent=1 // pred_check_branch
      %369 = sbr.rel (0) target = $region29
    $region28: #{tpu_custom_call.1} parent=1 // pred_region
      %370 = dma.done [#allocation4], 1024
    $region29: #{tpu_custom_call.1} parent=1 // pred_fallthru
      _
    %371 = vsyncpa [#allocation3], 1
    %372 = vsyncpa [#allocation6], 1
    %373 = vsyncpa [#allocation4], 1

</llo_original>
